<compile_context>
chip_gen: v7x
topology: tpu7x:2x2x1
jax: 0.10.0
libtpu: 0.0.40
codegen_flags: <defaults>
</compile_context>

<pallas_src>
import jax
import jax.numpy as jnp
from jax import lax
from jax.experimental import pallas as pl
from jax.experimental.pallas import tpu as pltpu


_LANES = 128
_SUBLANES = 8
_NEG_INF = jnp.float32(-1e30)


def _round_up(a, b):
    return (a + b - 1) // b * b


def _vmem_capacity_bytes():
    """Physical VMEM of the local TPU generation; conservative fallback (v7x)."""
    try:
        return int(pltpu.get_tpu_info().vmem_capacity_bytes)
    except Exception:
        return 64 * 1024 * 1024


def _pick_tm(d, n_pad, in_bytes, budget_bytes):
    """Largest M-tile (multiple of 8, <=1024) whose working set fits the budget.

    Accounts for double-buffered x / out tiles, the (double-buffered) resident
    prototypes + bias, and f32 in-kernel temporaries (logits / exp / shifted).
    """
    tm = 1024
    while tm > _SUBLANES:
        need = (2 * tm * d * in_bytes          # x tile (pipelined, 2 buffers)
                + 2 * tm * n_pad * 4           # out tile (pipelined, 2 buffers)
                + 2 * n_pad * d * in_bytes     # resident prototypes (default dbl-buf)
                + 2 * n_pad * 4                # bias
                + 3 * tm * n_pad * 4)          # f32 compute temporaries
        if need <= budget_bytes:
            break
        tm //= 2
    return max(_SUBLANES, tm)


def _prototypical_kernel(x_ref, pt_ref, bias_ref, out_ref):
    # x_ref:    (TM, D)      query tile (bf16 or f32), streamed over M
    # pt_ref:   (D, N_pad)   2 * prototypes^T, zero-padded columns (resident)
    # bias_ref: (1, N_pad)   -||p_j||^2 (f32); -1e30 for padded columns
    # out_ref:  (TM, N_pad)  log p(y), f32
    logits = lax.dot_general(
        x_ref[...], pt_ref[...],
        dimension_numbers=(((1,), (0,)), ((), ())),   # (M,K) x (K,N) -> no relayout
        preferred_element_type=jnp.float32,
    ) + bias_ref[...]

    # Row-wise log_softmax in f32.
    m = jnp.max(logits, axis=1, keepdims=True)
    shifted = logits - m
    lse = jnp.log(jnp.sum(jnp.exp(shifted), axis=1, keepdims=True))
    out_ref[...] = (shifted - lse).astype(out_ref.dtype)


def prototypical_layer(x, classes_per_iter, *, matmul_dtype=jnp.bfloat16):
    """x: (M, D) model outputs; first `classes_per_iter` rows are support vectors.

    Returns log_softmax(-squared_euclidean_dist(x, x[:N]), axis=1) as (M, N) f32.
    `matmul_dtype` controls the MXU input precision (bf16 default per perf review;
    accumulation and the softmax are always f32).
    """
    M, D = x.shape
    N = classes_per_iter
    N_pad = _round_up(max(N, _LANES), _LANES)
    in_bytes = jnp.dtype(matmul_dtype).itemsize

    # Generation-aware VMEM sizing: ~96 MiB on v5e/v6e (128 MiB), ~48 MiB on v7x (64 MiB).
    vmem_cap = _vmem_capacity_bytes()
    vmem_limit = min(int(vmem_cap * 3 // 4), 100 * 1024 * 1024)
    TM = _pick_tm(D, N_pad, in_bytes, budget_bytes=int(vmem_limit * 0.85))
    TM = min(TM, _round_up(M, _SUBLANES))                       # don't exceed (rounded) M
    # v7x has 2 TensorCores fed by the "parallel" grid axis: keep >= ~4 tiles
    # when M is large enough (floor of 256 rows so v5e/v6e tiles stay big).
    TM = min(TM, max(256, _round_up(pl.cdiv(M, 4), _SUBLANES)))
    TM = max(TM, _SUBLANES)
    grid = (pl.cdiv(M, TM),)

    # --- one-time wrapper prep (tiny vs. streaming x through the kernel) ---
    # In a real network x would already arrive in bf16; if it is f32 we cast once.
    x_in = x.astype(matmul_dtype)
    protos = x_in[:N].astype(jnp.float32)                       # (N, D), rounded to matmul_dtype
    p_sq = jnp.sum(protos * protos, axis=1)                     # (N,)  f32
    bias = (jnp.full((N_pad,), _NEG_INF, jnp.float32)
            .at[:N].set(-p_sq)
            .reshape(1, N_pad))
    # Pre-transposed, pre-scaled prototypes: kernel computes x @ (2 p^T) - ||p||^2.
    p_t = (jnp.zeros((D, N_pad), matmul_dtype)
           .at[:, :N].set((2.0 * protos).T.astype(matmul_dtype)))

    out_full = pl.pallas_call(
        _prototypical_kernel,
        out_shape=jax.ShapeDtypeStruct((M, N_pad), jnp.float32),
        grid=grid,
        in_specs=[
            pl.BlockSpec((TM, D), lambda i: (i, 0)),       # query tile, pipelined over M
            pl.BlockSpec((D, N_pad), lambda i: (0, 0)),    # 2*p^T, resident across tiles
            pl.BlockSpec((1, N_pad), lambda i: (0, 0)),    # -||p||^2 bias, resident
        ],
        out_specs=pl.BlockSpec((TM, N_pad), lambda i: (i, 0)),
        compiler_params=pltpu.CompilerParams(
            dimension_semantics=("parallel",),             # M tiles are independent
            vmem_limit_bytes=vmem_limit,
        ),
    )(x_in, p_t, bias)

    return out_full[:, :N]


def _reference(x, N):
    # Pure-JAX reference mirroring the PyTorch module (f32 math).
    protos = x[:N]
    diff = x[:, None, :] - protos[None, :, :]
    dists = jnp.sum(diff * diff, axis=2)
    return jax.nn.log_softmax(-dists, axis=1)


if __name__ == "__main__":
    # Small shapes implied by the forward: M samples of dim D, first N are supports.
    M, D, N = 16, 32, 4  # classes_per_iter = 4
    key = jax.random.PRNGKey(0)
    x = jax.random.normal(key, (M, D), dtype=jnp.float32)

    # (a) f32 matmul path: tight check against the PyTorch-equivalent reference.
    out_f32 = jax.block_until_ready(prototypical_layer(x, N, matmul_dtype=jnp.float32))
    ref_f32 = _reference(x, N)
    assert out_f32.shape == (M, N)
    assert jnp.allclose(out_f32, ref_f32, atol=2e-4, rtol=2e-4), \
        float(jnp.max(jnp.abs(out_f32 - ref_f32)))

    # (b) default bf16 fast path: tight check against the same math evaluated on
    #     bf16-rounded inputs (i.e. the module fed bf16 activations).
    out_bf16 = jax.block_until_ready(prototypical_layer(x, N))
    xb = x.astype(jnp.bfloat16).astype(jnp.float32)
    ref_bf16 = _reference(xb, N)
    assert out_bf16.shape == (M, N)
    assert jnp.allclose(out_bf16, ref_bf16, atol=2e-3, rtol=2e-3), \
        float(jnp.max(jnp.abs(out_bf16 - ref_bf16)))

    print("KERNEL_OK")
</pallas_src>

<mosaic_0001>
module attributes {stable_mosaic.version = 11 : i64} {
  func.func @_prototypical_kernel(%arg0: i32, %arg1: memref<16x32xf32, #tpu.memory_space<vmem>>, %arg2: memref<32x128xf32, #tpu.memory_space<vmem>>, %arg3: memref<1x128xf32, #tpu.memory_space<vmem>>, %arg4: memref<16x128xf32, #tpu.memory_space<vmem>>) attributes {dimension_semantics = [#tpu.dimension_semantics<parallel>], iteration_bounds = array<i64: 1>, scalar_prefetch = 0 : i64, scratch_operands = 0 : i64, tpu.core_type = #tpu.core_type<tc>, window_params = [{transform_indices = @transform_0, window_bounds = array<i64: 16, 32>}, {pipeline_mode = #tpu.pipeline_mode<synchronous>, transform_indices = @transform_1, window_bounds = array<i64: 32, 128>}, {pipeline_mode = #tpu.pipeline_mode<synchronous>, transform_indices = @transform_2, window_bounds = array<i64: 1, 128>}, {transform_indices = @transform_3, window_bounds = array<i64: 16, 128>}]} {
    %c0 = arith.constant 0 : index
    %c0_0 = arith.constant 0 : index
    %0 = vector.load %arg1[%c0, %c0_0] : memref<16x32xf32, #tpu.memory_space<vmem>>, vector<16x32xf32>
    %c0_1 = arith.constant 0 : index
    %c0_2 = arith.constant 0 : index
    %1 = vector.load %arg2[%c0_1, %c0_2] : memref<32x128xf32, #tpu.memory_space<vmem>>, vector<32x128xf32>
    %cst = arith.constant dense<0.000000e+00> : vector<16x128xf32>
    %2 = tpu.matmul %0, %1, %cst {dimension_numbers = #tpu.dot_dimension_numbers<[1], [0], [0], [1], [0, 0, 1, 1], [], []>} : vector<16x32xf32>, vector<32x128xf32>, vector<16x128xf32> -> vector<16x128xf32>
    %c0_3 = arith.constant 0 : index
    %c0_4 = arith.constant 0 : index
    %3 = vector.load %arg3[%c0_3, %c0_4] : memref<1x128xf32, #tpu.memory_space<vmem>>, vector<1x128xf32>
    %4 = vector.broadcast %3 : vector<1x128xf32> to vector<16x128xf32>
    %5 = arith.addf %2, %4 : vector<16x128xf32>
    %cst_5 = arith.constant dense<0xFF800000> : vector<16xf32>
    %6 = vector.multi_reduction <maximumf>, %5, %cst_5 [1] : vector<16x128xf32> to vector<16xf32>
    %7 = vector.shape_cast %6 : vector<16xf32> to vector<16x1xf32>
    %8 = vector.broadcast %7 : vector<16x1xf32> to vector<16x128xf32>
    %9 = arith.subf %5, %8 : vector<16x128xf32>
    %10 = math.exp %9 : vector<16x128xf32>
    %cst_6 = arith.constant dense<0.000000e+00> : vector<16xf32>
    %11 = vector.multi_reduction <add>, %10, %cst_6 [1] : vector<16x128xf32> to vector<16xf32>
    %12 = vector.shape_cast %11 : vector<16xf32> to vector<16x1xf32>
    %13 = math.log %12 : vector<16x1xf32>
    %14 = vector.broadcast %13 : vector<16x1xf32> to vector<16x128xf32>
    %15 = arith.subf %9, %14 : vector<16x128xf32>
    %c0_7 = arith.constant 0 : index
    %c0_8 = arith.constant 0 : index
    %16 = vector.load %arg4[%c0_7, %c0_8] : memref<16x128xf32, #tpu.memory_space<vmem>>, vector<16x128xf32>
    tpu.vector_store %arg4[%c0_7, %c0_8], %15 {strides = array<i32>} : memref<16x128xf32, #tpu.memory_space<vmem>>, vector<16x128xf32>,
    return
  }
  func.func @transform_0(%arg0: i32) -> (i32, i32) {
    %c0_i32 = arith.constant 0 : i32
    %c0_i32_0 = arith.constant 0 : i32
    return %arg0, %c0_i32 : i32, i32
  }
  func.func @transform_1(%arg0: i32) -> (i32, i32) {
    %c0_i32 = arith.constant 0 : i32
    %c0_i32_0 = arith.constant 0 : i32
    %c0_i32_1 = arith.constant 0 : i32
    return %c0_i32, %c0_i32_0 : i32, i32
  }
  func.func @transform_2(%arg0: i32) -> (i32, i32) {
    %c0_i32 = arith.constant 0 : i32
    %c0_i32_0 = arith.constant 0 : i32
    %c0_i32_1 = arith.constant 0 : i32
    return %c0_i32, %c0_i32_0 : i32, i32
  }
  func.func @transform_3(%arg0: i32) -> (i32, i32) {
    %c0_i32 = arith.constant 0 : i32
    %c0_i32_0 = arith.constant 0 : i32
    return %arg0, %c0_i32 : i32, i32
  }
}

</mosaic_0001>

<llo_original>
// kernel: tpu_custom_call.1
$region0: #{tpu_custom_call.1}
  #allocation0 [shape = 'u32[]', space=smem, size = 0x4, offset = 0x4, fixed_abs, tag = 'smem constant byte address 0x4 - core index']
  #allocation1 [shape = 'u32[144,128]{1,0:T(1,128)}', space=vmem, size = 0x12000, scoped, tag = 'internal scratch']
  %s0 = inlined_call_operand.hbm [shape: f32[16,32], index: 0, kind: input, shape index: {}]
  %s1 = inlined_call_operand.hbm [shape: f32[32,128], index: 1, kind: input, shape index: {}]
  %s2 = inlined_call_operand.vmem [shape: f32[1,128], index: 2, kind: input, shape index: {}]
  %s3 = inlined_call_operand.hbm [shape: f32[16,128], index: 3, kind: output, shape index: {}]
  %s4 = sld [smem:[#allocation0]]
  $region30: #{tpu_custom_call.1} parent=0
    _
  %s6 = ssub.s32 1, %s4
  %s7 = scalar_select 0, %s6, %s4
  $region1: #{tpu_custom_call.1} parent=0
    #allocation2 [shape = 'u8[8192]{0}', space=vmem, size = 0x2000, scoped, tag = 'input window, operand 0, single buffered']
    #allocation3 [shape = 's32[1]{0}', space=sflag, size = 0x4, scoped, tag = 'scoped memory for tpu_custom_call.1']
    #allocation4 [shape = 's32[1]{0}', space=sflag, size = 0x4, scoped, tag = 'scoped memory for tpu_custom_call.1']
    #allocation5 [shape = 'u8[16384]{0}', space=vmem, size = 0x4000, scoped, tag = 'input window, operand 1, single buffered']
    #allocation6 [shape = 's32[1]{0}', space=sflag, size = 0x4, scoped, tag = 'scoped memory for tpu_custom_call.1']
    #allocation7 [shape = 'u8[8192]{0}', space=vmem, size = 0x2000, scoped, tag = 'output window, operand 0, single buffered']
    %8 = vsyncpa [#allocation3], 0
    %9 = vsyncpa [#allocation6], 0
    %10 = vsyncpa [#allocation4], 0
    // Predicated region
    $region2: #{tpu_custom_call.1} parent=1 // pred_check
      _
    $region3: #{tpu_custom_call.1} parent=1 // pred_check_branch
      %12 = sbr.rel (0) target = $region5
    $region4: #{tpu_custom_call.1} parent=1 // pred_region
      %s14 = ssub.s32 256, 256
      %15 = vsyncadd [#allocation3], %s14
      %s16 = sshll.u32 [#allocation2], 4
      %s17 = int_to_ptr.vmem [resolvable:$true] %s16
      %22 = dma.hbm_to_vmem [thread:$0]  %s0, 256, %s17, [#allocation3], 128, 128, 8
    $region5: #{tpu_custom_call.1} parent=1 // pred_fallthru
      _
    // Predicated region
    $region6: #{tpu_custom_call.1} parent=1 // pred_check
      _
    $region7: #{tpu_custom_call.1} parent=1 // pred_check_branch
      %24 = sbr.rel (0) target = $region9
    $region8: #{tpu_custom_call.1} parent=1 // pred_region
      %s26 = ssub.s32 512, 512
      %27 = vsyncadd [#allocation6], %s26
      %s28 = sshll.u32 [#allocation5], 4
      %s29 = int_to_ptr.vmem [resolvable:$true] %s28
      %34 = dma.hbm_to_vmem [thread:$0]  %s1, 512, %s29, [#allocation6], 128, 128, 8
    $region9: #{tpu_custom_call.1} parent=1 // pred_fallthru
      _
    // Predicated region
    $region10: #{tpu_custom_call.1} parent=1 // pred_check
      _
    $region11: #{tpu_custom_call.1} parent=1 // pred_check_branch
      %36 = sbr.rel (0) target = $region13
    $region12: #{tpu_custom_call.1} parent=1 // pred_region
      _
    $region13: #{tpu_custom_call.1} parent=1 // pred_fallthru
      _
    // Predicated region
    $region14: #{tpu_custom_call.1} parent=1 // pred_check
      _
    $region15: #{tpu_custom_call.1} parent=1 // pred_check_branch
      %38 = sbr.rel (0) target = $region17
    $region16: #{tpu_custom_call.1} parent=1 // pred_region
      %39 = dma.done [#allocation3], 256
    $region17: #{tpu_custom_call.1} parent=1 // pred_fallthru
      _
    // Predicated region
    $region18: #{tpu_custom_call.1} parent=1 // pred_check
      _
    $region19: #{tpu_custom_call.1} parent=1 // pred_check_branch
      %41 = sbr.rel (0) target = $region21
    $region20: #{tpu_custom_call.1} parent=1 // pred_region
      %42 = dma.done [#allocation6], 512
    $region21: #{tpu_custom_call.1} parent=1 // pred_fallthru
      _
    %v43 = vld [vmem:[#allocation2] sm:$0xff]
    %v44 = vld [vmem:[#allocation2 + $0x8] sm:$0xff]
    %v45 = vld [vmem:[#allocation5] sm:$0xff]
    %v46 = vld [vmem:[#allocation5 + $0x8] sm:$0xff]
    %v47 = vld [vmem:[#allocation5 + $0x10] sm:$0xff]
    %v48 = vld [vmem:[#allocation5 + $0x18] sm:$0xff]
    %v49 = vld [vmem:[%s2] sm:$0x1]
    %v51 = vlaneseq
    %v52 = vshrl.u32 %v51, 7
    %v53 = vsub.s32 0, %v52
    %v54 = vrot.slane %v49, %v53
    %vm56 = vcmask 261120
    %v58 = vsel %vm56, %v43, 0
    %v61 = vsel %vm56, %v44, 0
    %63 = vmatprep.subr.mxu0 0.0
    %64 = vmatpush1.msra.mxu0 %v45
    %65 = vmatprep.subr.mxu0 0.0
    %66 = vmatpush1.msra.mxu0 %v46
    %67 = vmatprep.subr.mxu0 0.0
    %68 = vmatpush1.msra.mxu0 %v47
    %69 = vmatprep.subr.mxu0 0.0
    %70 = vmatpush1.msra.mxu0 %v48
    %71 = vmatprep.subr.mxu0 0.0
    %72 = vmatpush1.msra.mxu0 0.0
    %73 = vmatprep.subr.mxu0 0.0
    %74 = vmatpush1.msra.mxu0 0.0
    %75 = vmatprep.subr.mxu0 0.0
    %76 = vmatpush1.msra.mxu0 0.0
    %77 = vmatprep.subr.mxu0 0.0
    %78 = vmatpush1.msra.mxu0 0.0
    %79 = vmatprep.subr.mxu0 0.0
    %80 = vmatpush1.msra.mxu0 0.0
    %81 = vmatprep.subr.mxu0 0.0
    %82 = vmatpush1.msra.mxu0 0.0
    %83 = vmatprep.subr.mxu0 0.0
    %84 = vmatpush1.msra.mxu0 0.0
    %85 = vmatprep.subr.mxu0 0.0
    %86 = vmatpush1.msra.mxu0 0.0
    %87 = vmatprep.subr.mxu0 0.0
    %88 = vmatpush1.msra.mxu0 0.0
    %89 = vmatprep.subr.mxu0 0.0
    %90 = vmatpush1.msra.mxu0 0.0
    %91 = vmatprep.subr.mxu0 0.0
    %92 = vmatpush1.msra.mxu0 0.0
    %93 = vmatprep.subr.mxu0 0.0
    %94 = vmatpush1.msra.mxu0 0.0
    %95 = vmatprep.subr.mxu0 0.0
    %96 = vmatpush1.msra.mxu0 0.0
    %97 = vmatprep.subr.mxu0 0.0
    %98 = vmatpush1.msra.mxu0 0.0
    %99 = vmatprep.subr.mxu0 0.0
    %100 = vmatpush1.msra.mxu0 0.0
    %101 = vmatprep.subr.mxu0 0.0
    %102 = vmatpush1.msra.mxu0 0.0
    %103 = vmatprep.subr.mxu0 0.0
    %104 = vmatpush1.msra.mxu0 0.0
    %105 = vmatprep.subr.mxu0 0.0
    %106 = vmatpush1.msra.mxu0 0.0
    %107 = vmatprep.subr.mxu0 0.0
    %108 = vmatpush1.msra.mxu0 0.0
    %109 = vmatprep.subr.mxu0 0.0
    %110 = vmatpush1.msra.mxu0 0.0
    %111 = vmatprep.subr.mxu0 0.0
    %112 = vmatpush1.msra.mxu0 0.0
    %113 = vmatprep.subr.mxu0 0.0
    %114 = vmatpush1.msra.mxu0 0.0
    %115 = vmatprep.subr.mxu0 0.0
    %116 = vmatpush1.msra.mxu0 0.0
    %117 = vmatprep.subr.mxu0 0.0
    %118 = vmatpush1.msra.mxu0 0.0
    %119 = vmatprep.subr.mxu0 0.0
    %120 = vmatpush1.msra.mxu0 0.0
    %121 = vmatprep.subr.mxu0 0.0
    %122 = vmatpush1.msra.mxu0 0.0
    %123 = vmatprep.subr.mxu0 0.0
    %124 = vmatpush1.msra.mxu0 0.0
    %125 = vmatprep.subr.mxu0 0.0
    %126 = vmatpush1.msra.mxu0 0.0
    %127 = vmatprep.mubr.f32.mxu0 0.0
    %128 = vmatmul.mubr.f32.gmra.mrb[0].mxu0 %v58
    %v129 = vpop.f32.mrb[0].mxu0
    %v130 = vadd.f32 %v54, %v129
    %v131 = vpop.f32.mrb[0].mxu0
    %132 = vmatprep.mubr.f32.mxu0 0.0
    %133 = vmatmul.mubr.f32.gmra.mrb[0].mxu0 %v61
    %v134 = vpop.f32.mrb[0].mxu0
    %v135 = vadd.f32 %v54, %v134
    %v136 = vpop.f32.mrb[0].mxu0
    %137 = vdwg.mxu0
    %138 = vmax.xlane.f32.xlu0 %v130
    %v139 = vpop.xlane.xlu0 %138
    %140 = vmax.xlane.f32.xlu0 %v135
    %v141 = vpop.xlane.xlu0 %140
    %v142 = vsub.f32 %v130, %v139
    %v143 = vsub.f32 %v135, %v141
    %v144 = vmul.f32 %v142, 1.442695
    %v145 = vpow.pop %v144
    %v146 = vmul.f32 %v143, 1.442695
    %v147 = vpow.pop %v146
    %148 = vadd.xlane.f32.xlu0 %v145
    %v149 = vpop.xlane.xlu0 %148
    %150 = vadd.xlane.f32.xlu0 %v147
    %v151 = vpop.xlane.xlu0 %150
    %v152 = vlog2.pop %v149
    %v153 = vmul.f32 %v152, 0.6931472
    %v154 = vlog2.pop %v151
    %v155 = vmul.f32 %v154, 0.6931472
    %v156 = vsub.f32 %v142, %v153
    %v157 = vsub.f32 %v143, %v155
    %158 = vst [vmem:[#allocation7] sm:$0xff] %v156
    %159 = vst [vmem:[#allocation7 + $0x8] sm:$0xff] %v157
    // Predicated region
    $region22: #{tpu_custom_call.1} parent=1 // pred_check
      _
    $region23: #{tpu_custom_call.1} parent=1 // pred_check_branch
      %161 = sbr.rel (0) target = $region25
    $region24: #{tpu_custom_call.1} parent=1 // pred_region
      %s163 = ssub.s32 256, 256
      %164 = vsyncadd [#allocation4], %s163
      %s165 = sshll.u32 [#allocation7], 4
      %s166 = int_to_ptr.vmem [resolvable:$true] %s165
      %171 = dma.vmem_to_hbm [thread:$0]  %s166, 256, %s3, [#allocation4], 128, 128, 8
    $region25: #{tpu_custom_call.1} parent=1 // pred_fallthru
      _
    // Predicated region
    $region26: #{tpu_custom_call.1} parent=1 // pred_check
      _
    $region27: #{tpu_custom_call.1} parent=1 // pred_check_branch
      %173 = sbr.rel (0) target = $region29
    $region28: #{tpu_custom_call.1} parent=1 // pred_region
      %174 = dma.done [#allocation4], 256
    $region29: #{tpu_custom_call.1} parent=1 // pred_fallthru
      _
    %175 = vsyncpa [#allocation3], 1
    %176 = vsyncpa [#allocation6], 1
    %177 = vsyncpa [#allocation4], 1

</llo_original>
